<compile_context>
chip_gen: v6e
topology: v6e:2x2x1
jax: 0.10.0
libtpu: 0.0.40
codegen_flags: <defaults>
</compile_context>

<pallas_src>
import jax
import jax.numpy as jnp
from jax import lax
from jax.experimental import pallas as pl
from jax.experimental.pallas import tpu as pltpu

_LANE = 128


def _round_up(x, m):
    return ((x + m - 1) // m) * m


def _polar_loss_kernel(scal_ref, pdir_ref, gdir_ref, out_ref):
    # scal_ref: (7, TN) f32 rows = [pred_angle, pred_w, pred_h,
    #                               gt_angle, gt_w, gt_h, mask]
    # pdir_ref: (C_dir, TN) f32 predicted-direction logits
    # gdir_ref: (C_dir, TN) f32 ground-truth-direction logits
    # out_ref : (2, TN) f32 rows = [per_row_loss, per_row_mask]
    s = scal_ref[...]
    pred_angle = s[0:1, :] * 10.0
    pred_w = s[1:2, :]
    pred_h = s[2:3, :]
    gt_angle = s[3:4, :] * 10.0
    gt_w = s[4:5, :]
    gt_h = s[5:6, :]
    msk = s[6:7, :]

    def first_argmax(logits):
        # argmax over the class (sublane) axis, first maximal index.
        cd = logits.shape[0]
        mx = jnp.max(logits, axis=0, keepdims=True)
        ids = lax.broadcasted_iota(jnp.int32, logits.shape, 0)
        return jnp.min(jnp.where(logits == mx, ids, cd), axis=0, keepdims=True)

    pdir = first_argmax(pdir_ref[...])  # (1, TN) i32
    gdir = first_argmax(gdir_ref[...])  # (1, TN) i32

    def angle_res(direction, angle):
        return jnp.where(direction == 0, 90.0 - angle,
               jnp.where(direction == 1, angle + 90.0,
               jnp.where(direction == 2, angle, 0.0)))

    pa_res = angle_res(pdir, pred_angle) * msk
    ga_res = angle_res(gdir, gt_angle) * msk

    pw_m = pred_w * msk
    ph_m = pred_h * msk

    d_ang = pa_res - ga_res
    d_ang2 = d_ang * d_ang
    dw = pw_m - gt_w
    dh = ph_m - gt_h
    w_loss = jnp.log(dw * dw + d_ang2 + 1.0)
    h_loss = jnp.log(dh * dh + d_ang2 + 1.0)
    per_row = 0.5 * (w_loss + h_loss)  # (1, TN)

    out_ref[0:1, :] = per_row
    out_ref[1:2, :] = msk


def _gather_feat_nchw(feat, ind):
    # feat: [B, C, H, W]; ind: [B, K] spatial indices into H*W -> [B, C, K].
    # Same values as PyTorch's _tranpose_and_gather_feat (just channel-major),
    # but without materializing a full NHWC transpose of the map.
    b, c, h, w = feat.shape
    flat = feat.reshape(b, c, h * w)
    return jnp.take_along_axis(flat, ind[:, None, :].astype(jnp.int32), axis=2)


def polar_loss(output, mask, ind, target):
    """output: (angle [B,1,H,W], wh [B,2,H,W], direction [B,Cd,H,W]) float maps
    mask: [B,K]; ind: [B,K] int spatial indices
    target: (gt_angle [B,K,1], gt_wh [B,K,2], gt_direction [B,Cd,H,W])
    Returns scalar f32 loss."""
    out_angle, out_wh, out_dir = output
    gt_angle, gt_wh, gt_dir = target

    b, cd, _, _ = out_dir.shape
    k = ind.shape[1]
    n = b * k

    # ---- cheap JAX glue: gathers of only the K picked positions -------------
    pa = _gather_feat_nchw(out_angle, ind)[:, 0, :]          # [B, K]
    pwh = _gather_feat_nchw(out_wh, ind)                      # [B, 2, K]
    pw, ph = pwh[:, 0, :], pwh[:, 1, :]                       # [B, K]
    pdir = _gather_feat_nchw(out_dir, ind)                    # [B, Cd, K]
    gdir = _gather_feat_nchw(gt_dir, ind)                     # [B, Cd, K]

    ga = gt_angle.reshape(b, k).astype(jnp.float32)           # [B, K]
    gw = gt_wh[..., 0].astype(jnp.float32)                    # [B, K]
    gh = gt_wh[..., 1].astype(jnp.float32)                    # [B, K]
    msk = mask.reshape(b, k).astype(jnp.float32)              # [B, K]

    # ---- lane-dense layout: rows on the 128-lane axis ------------------------
    scal = jnp.stack(
        [pa.reshape(n), pw.reshape(n), ph.reshape(n),
         ga.reshape(n), gw.reshape(n), gh.reshape(n), msk.reshape(n)],
        axis=0).astype(jnp.float32)                           # (7, N)
    pdir2 = jnp.transpose(pdir, (1, 0, 2)).reshape(cd, n).astype(jnp.float32)
    gdir2 = jnp.transpose(gdir, (1, 0, 2)).reshape(cd, n).astype(jnp.float32)

    tn = min(2048, _round_up(n, _LANE))                       # 128-aligned tile
    n_pad = _round_up(n, tn)
    pad = n_pad - n
    if pad:
        # Zero padding contributes exactly 0 loss and 0 mask.
        scal = jnp.pad(scal, ((0, 0), (0, pad)))
        pdir2 = jnp.pad(pdir2, ((0, 0), (0, pad)))
        gdir2 = jnp.pad(gdir2, ((0, 0), (0, pad)))

    grid = (n_pad // tn,)

    cost = pl.CostEstimate(
        flops=n_pad * (40 + 8 * cd),
        transcendentals=2 * n_pad,
        bytes_accessed=4 * n_pad * (7 + 2 * cd + 2),
    )

    partials = pl.pallas_call(
        _polar_loss_kernel,
        out_shape=jax.ShapeDtypeStruct((2, n_pad), jnp.float32),
        grid=grid,
        in_specs=[
            pl.BlockSpec((7, tn), lambda i: (0, i)),
            pl.BlockSpec((cd, tn), lambda i: (0, i)),
            pl.BlockSpec((cd, tn), lambda i: (0, i)),
        ],
        out_specs=pl.BlockSpec((2, tn), lambda i: (0, i)),
        compiler_params=pltpu.CompilerParams(
            dimension_semantics=("parallel",)),
        cost_estimate=cost,
    )(scal, pdir2, gdir2)

    loss_sum = jnp.sum(partials[0])
    mask_sum = jnp.sum(partials[1])
    return loss_sum / (mask_sum + 0.0001)


# ----------------------------- pure-JAX reference -----------------------------
def _reference(output, mask, ind, target):
    out_angle, out_wh, out_dir = output
    gt_angle, gt_wh, gt_dir = target

    def tg(feat, idx):  # PyTorch _tranpose_and_gather_feat -> [B, K, C]
        bb, cc, hh, ww = feat.shape
        f = jnp.transpose(feat, (0, 2, 3, 1)).reshape(bb, hh * ww, cc)
        return jnp.take_along_axis(f, idx[:, :, None].astype(jnp.int32), axis=1)

    pred_angle = tg(out_angle, ind)                           # [B,K,1]
    m = jnp.broadcast_to(mask[:, :, None].astype(jnp.float32), pred_angle.shape)
    pred_angle = pred_angle * 10.0
    pred_dir = jnp.argmax(tg(out_dir, ind), axis=2)[..., None]
    pa_res = jnp.where(pred_dir == 0, 90.0 - pred_angle,
             jnp.where(pred_dir == 1, pred_angle + 90.0,
             jnp.where(pred_dir == 2, pred_angle, 0.0))) * m

    ga = gt_angle.astype(jnp.float32) * 10.0
    gdir = jnp.argmax(tg(gt_dir, ind), axis=2)[..., None]
    ga_res = jnp.where(gdir == 0, 90.0 - ga,
             jnp.where(gdir == 1, ga + 90.0,
             jnp.where(gdir == 2, ga, 0.0))) * m

    output_w = out_wh[:, 0:1, :, :]
    output_h = out_wh[:, 1:2, :, :]
    gt_w = gt_wh[:, :, 0:1]
    gt_h = gt_wh[:, :, 1:2]
    pred_w = tg(output_w, ind) * m
    pred_h = tg(output_h, ind) * m

    w_ed = (pred_w - gt_w) ** 2 + (pa_res - ga_res) ** 2
    w_loss = jnp.log(w_ed + 1.0)
    h_ed = (pred_h - gt_h) ** 2 + (pa_res - ga_res) ** 2
    h_loss = jnp.log(h_ed + 1.0)
    return jnp.sum((w_loss + h_loss) / 2.0) / (jnp.sum(m) + 0.0001)


if __name__ == "__main__":
    key = jax.random.PRNGKey(0)
    B, H, W, K, CD = 2, 16, 16, 8, 3

    ks = jax.random.split(key, 8)
    out_angle = jax.random.normal(ks[0], (B, 1, H, W), dtype=jnp.float32)
    out_wh = jax.random.normal(ks[1], (B, 2, H, W), dtype=jnp.float32)
    out_dir = jax.random.normal(ks[2], (B, CD, H, W), dtype=jnp.float32)
    gt_angle = jax.random.uniform(ks[3], (B, K, 1), jnp.float32, 0.0, 9.0)
    gt_wh = jax.random.uniform(ks[4], (B, K, 2), jnp.float32, 0.0, 5.0)
    gt_dir = jax.random.normal(ks[5], (B, CD, H, W), dtype=jnp.float32)
    ind = jax.random.randint(ks[6], (B, K), 0, H * W, dtype=jnp.int32)
    mask = (jax.random.uniform(ks[7], (B, K)) > 0.4).astype(jnp.float32)
    mask = mask.at[0, 0].set(1.0)  # ensure at least one valid entry

    output = (out_angle, out_wh, out_dir)
    target = (gt_angle, gt_wh, gt_dir)

    loss = jax.block_until_ready(polar_loss(output, mask, ind, target))
    ref = jax.block_until_ready(_reference(output, mask, ind, target))

    assert jnp.allclose(loss, ref, rtol=1e-4, atol=1e-4), (loss, ref)
    print("KERNEL_OK")
</pallas_src>

<mosaic_0001>
module attributes {stable_mosaic.version = 11 : i64} {
  func.func @_polar_loss_kernel(%arg0: i32, %arg1: memref<7x128xf32, #tpu.memory_space<vmem>>, %arg2: memref<3x128xf32, #tpu.memory_space<vmem>>, %arg3: memref<3x128xf32, #tpu.memory_space<vmem>>, %arg4: memref<2x128xf32, #tpu.memory_space<vmem>>) attributes {dimension_semantics = [#tpu.dimension_semantics<parallel>], iteration_bounds = array<i64: 1>, scalar_prefetch = 0 : i64, scratch_operands = 0 : i64, tpu.core_type = #tpu.core_type<tc>, window_params = [{transform_indices = @transform_0, window_bounds = array<i64: 7, 128>}, {transform_indices = @transform_1, window_bounds = array<i64: 3, 128>}, {transform_indices = @transform_2, window_bounds = array<i64: 3, 128>}, {transform_indices = @transform_3, window_bounds = array<i64: 2, 128>}]} {
    %c0 = arith.constant 0 : index
    %c0_0 = arith.constant 0 : index
    %0 = vector.load %arg1[%c0, %c0_0] : memref<7x128xf32, #tpu.memory_space<vmem>>, vector<7x128xf32>
    %1 = vector.extract_strided_slice %0 {offsets = [0, 0], sizes = [1, 128], strides = [1, 1]} : vector<7x128xf32> to vector<1x128xf32>
    %cst = arith.constant 1.000000e+01 : f32
    %2 = vector.broadcast %cst : f32 to vector<1x128xf32>
    %3 = arith.mulf %1, %2 : vector<1x128xf32>
    %4 = vector.extract_strided_slice %0 {offsets = [1, 0], sizes = [1, 128], strides = [1, 1]} : vector<7x128xf32> to vector<1x128xf32>
    %5 = vector.extract_strided_slice %0 {offsets = [2, 0], sizes = [1, 128], strides = [1, 1]} : vector<7x128xf32> to vector<1x128xf32>
    %6 = vector.extract_strided_slice %0 {offsets = [3, 0], sizes = [1, 128], strides = [1, 1]} : vector<7x128xf32> to vector<1x128xf32>
    %cst_1 = arith.constant 1.000000e+01 : f32
    %7 = vector.broadcast %cst_1 : f32 to vector<1x128xf32>
    %8 = arith.mulf %6, %7 : vector<1x128xf32>
    %9 = vector.extract_strided_slice %0 {offsets = [4, 0], sizes = [1, 128], strides = [1, 1]} : vector<7x128xf32> to vector<1x128xf32>
    %10 = vector.extract_strided_slice %0 {offsets = [5, 0], sizes = [1, 128], strides = [1, 1]} : vector<7x128xf32> to vector<1x128xf32>
    %11 = vector.extract_strided_slice %0 {offsets = [6, 0], sizes = [1, 128], strides = [1, 1]} : vector<7x128xf32> to vector<1x128xf32>
    %c0_2 = arith.constant 0 : index
    %c0_3 = arith.constant 0 : index
    %12 = vector.load %arg2[%c0_2, %c0_3] : memref<3x128xf32, #tpu.memory_space<vmem>>, vector<3x128xf32>
    %cst_4 = arith.constant dense<0xFF800000> : vector<128xf32>
    %13 = vector.multi_reduction <maximumf>, %12, %cst_4 [0] : vector<3x128xf32> to vector<128xf32>
    %14 = vector.shape_cast %13 : vector<128xf32> to vector<1x128xf32>
    %15 = tpu.iota {dimensions = array<i32: 0>} : vector<3x128xi32>
    %16 = vector.broadcast %14 : vector<1x128xf32> to vector<3x128xf32>
    %17 = arith.cmpf oeq, %12, %16 : vector<3x128xf32>
    %c3_i32 = arith.constant 3 : i32
    %18 = vector.broadcast %c3_i32 : i32 to vector<3x128xi32>
    %19 = arith.select %17, %15, %18 : vector<3x128xi1>, vector<3x128xi32>
    %cst_5 = arith.constant dense<2147483647> : vector<128xi32>
    %20 = vector.multi_reduction <minsi>, %19, %cst_5 [0] : vector<3x128xi32> to vector<128xi32>
    %21 = vector.shape_cast %20 : vector<128xi32> to vector<1x128xi32>
    %c0_6 = arith.constant 0 : index
    %c0_7 = arith.constant 0 : index
    %22 = vector.load %arg3[%c0_6, %c0_7] : memref<3x128xf32, #tpu.memory_space<vmem>>, vector<3x128xf32>
    %cst_8 = arith.constant dense<0xFF800000> : vector<128xf32>
    %23 = vector.multi_reduction <maximumf>, %22, %cst_8 [0] : vector<3x128xf32> to vector<128xf32>
    %24 = vector.shape_cast %23 : vector<128xf32> to vector<1x128xf32>
    %25 = tpu.iota {dimensions = array<i32: 0>} : vector<3x128xi32>
    %26 = vector.broadcast %24 : vector<1x128xf32> to vector<3x128xf32>
    %27 = arith.cmpf oeq, %22, %26 : vector<3x128xf32>
    %c3_i32_9 = arith.constant 3 : i32
    %28 = vector.broadcast %c3_i32_9 : i32 to vector<3x128xi32>
    %29 = arith.select %27, %25, %28 : vector<3x128xi1>, vector<3x128xi32>
    %cst_10 = arith.constant dense<2147483647> : vector<128xi32>
    %30 = vector.multi_reduction <minsi>, %29, %cst_10 [0] : vector<3x128xi32> to vector<128xi32>
    %31 = vector.shape_cast %30 : vector<128xi32> to vector<1x128xi32>
    %c0_i32 = arith.constant 0 : i32
    %32 = vector.broadcast %c0_i32 : i32 to vector<1x128xi32>
    %33 = arith.cmpi eq, %21, %32 : vector<1x128xi32>
    %cst_11 = arith.constant 9.000000e+01 : f32
    %34 = vector.broadcast %cst_11 : f32 to vector<1x128xf32>
    %35 = arith.subf %34, %3 : vector<1x128xf32>
    %c1_i32 = arith.constant 1 : i32
    %36 = vector.broadcast %c1_i32 : i32 to vector<1x128xi32>
    %37 = arith.cmpi eq, %21, %36 : vector<1x128xi32>
    %cst_12 = arith.constant 9.000000e+01 : f32
    %38 = vector.broadcast %cst_12 : f32 to vector<1x128xf32>
    %39 = arith.addf %3, %38 : vector<1x128xf32>
    %c2_i32 = arith.constant 2 : i32
    %40 = vector.broadcast %c2_i32 : i32 to vector<1x128xi32>
    %41 = arith.cmpi eq, %21, %40 : vector<1x128xi32>
    %cst_13 = arith.constant 0.000000e+00 : f32
    %42 = vector.broadcast %cst_13 : f32 to vector<1x128xf32>
    %43 = arith.select %41, %3, %42 : vector<1x128xi1>, vector<1x128xf32>
    %44 = arith.select %37, %39, %43 : vector<1x128xi1>, vector<1x128xf32>
    %45 = arith.select %33, %35, %44 : vector<1x128xi1>, vector<1x128xf32>
    %46 = arith.mulf %45, %11 : vector<1x128xf32>
    %c0_i32_14 = arith.constant 0 : i32
    %47 = vector.broadcast %c0_i32_14 : i32 to vector<1x128xi32>
    %48 = arith.cmpi eq, %31, %47 : vector<1x128xi32>
    %cst_15 = arith.constant 9.000000e+01 : f32
    %49 = vector.broadcast %cst_15 : f32 to vector<1x128xf32>
    %50 = arith.subf %49, %8 : vector<1x128xf32>
    %c1_i32_16 = arith.constant 1 : i32
    %51 = vector.broadcast %c1_i32_16 : i32 to vector<1x128xi32>
    %52 = arith.cmpi eq, %31, %51 : vector<1x128xi32>
    %cst_17 = arith.constant 9.000000e+01 : f32
    %53 = vector.broadcast %cst_17 : f32 to vector<1x128xf32>
    %54 = arith.addf %8, %53 : vector<1x128xf32>
    %c2_i32_18 = arith.constant 2 : i32
    %55 = vector.broadcast %c2_i32_18 : i32 to vector<1x128xi32>
    %56 = arith.cmpi eq, %31, %55 : vector<1x128xi32>
    %cst_19 = arith.constant 0.000000e+00 : f32
    %57 = vector.broadcast %cst_19 : f32 to vector<1x128xf32>
    %58 = arith.select %56, %8, %57 : vector<1x128xi1>, vector<1x128xf32>
    %59 = arith.select %52, %54, %58 : vector<1x128xi1>, vector<1x128xf32>
    %60 = arith.select %48, %50, %59 : vector<1x128xi1>, vector<1x128xf32>
    %61 = arith.mulf %60, %11 : vector<1x128xf32>
    %62 = arith.mulf %4, %11 : vector<1x128xf32>
    %63 = arith.mulf %5, %11 : vector<1x128xf32>
    %64 = arith.subf %46, %61 : vector<1x128xf32>
    %65 = arith.mulf %64, %64 : vector<1x128xf32>
    %66 = arith.subf %62, %9 : vector<1x128xf32>
    %67 = arith.subf %63, %10 : vector<1x128xf32>
    %68 = arith.mulf %66, %66 : vector<1x128xf32>
    %69 = arith.addf %68, %65 : vector<1x128xf32>
    %cst_20 = arith.constant 1.000000e+00 : f32
    %70 = vector.broadcast %cst_20 : f32 to vector<1x128xf32>
    %71 = arith.addf %69, %70 : vector<1x128xf32>
    %72 = math.log %71 : vector<1x128xf32>
    %73 = arith.mulf %67, %67 : vector<1x128xf32>
    %74 = arith.addf %73, %65 : vector<1x128xf32>
    %cst_21 = arith.constant 1.000000e+00 : f32
    %75 = vector.broadcast %cst_21 : f32 to vector<1x128xf32>
    %76 = arith.addf %74, %75 : vector<1x128xf32>
    %77 = math.log %76 : vector<1x128xf32>
    %78 = arith.addf %72, %77 : vector<1x128xf32>
    %cst_22 = arith.constant 5.000000e-01 : f32
    %79 = vector.broadcast %cst_22 : f32 to vector<1x128xf32>
    %80 = arith.mulf %79, %78 : vector<1x128xf32>
    %c0_23 = arith.constant 0 : index
    %c0_24 = arith.constant 0 : index
    %81 = vector.load %arg4[%c0_23, %c0_24] : memref<2x128xf32, #tpu.memory_space<vmem>>, vector<1x128xf32>
    tpu.vector_store %arg4[%c0_23, %c0_24], %80 {strides = array<i32>} : memref<2x128xf32, #tpu.memory_space<vmem>>, vector<1x128xf32>,
    %c1 = arith.constant 1 : index
    %c0_25 = arith.constant 0 : index
    %82 = vector.load %arg4[%c1, %c0_25] : memref<2x128xf32, #tpu.memory_space<vmem>>, vector<1x128xf32>
    tpu.vector_store %arg4[%c1, %c0_25], %11 {strides = array<i32>} : memref<2x128xf32, #tpu.memory_space<vmem>>, vector<1x128xf32>,
    return
  }
  func.func @transform_0(%arg0: i32) -> (i32, i32) {
    %c0_i32 = arith.constant 0 : i32
    %c0_i32_0 = arith.constant 0 : i32
    return %c0_i32, %arg0 : i32, i32
  }
  func.func @transform_1(%arg0: i32) -> (i32, i32) {
    %c0_i32 = arith.constant 0 : i32
    %c0_i32_0 = arith.constant 0 : i32
    return %c0_i32, %arg0 : i32, i32
  }
  func.func @transform_2(%arg0: i32) -> (i32, i32) {
    %c0_i32 = arith.constant 0 : i32
    %c0_i32_0 = arith.constant 0 : i32
    return %c0_i32, %arg0 : i32, i32
  }
  func.func @transform_3(%arg0: i32) -> (i32, i32) {
    %c0_i32 = arith.constant 0 : i32
    %c0_i32_0 = arith.constant 0 : i32
    return %c0_i32, %arg0 : i32, i32
  }
}

</mosaic_0001>

<llo_original>
// kernel: tpu_custom_call.1
$region0: #{tpu_custom_call.1}
  #allocation0 [shape = 'u32[]', space=smem, size = 0x4, offset = 0x4, fixed_abs, tag = 'smem constant byte address 0x4 - core index']
  #allocation1 [shape = 'u32[144,128]{1,0:T(1,128)}', space=vmem, size = 0x12000, scoped, tag = 'internal scratch']
  %s0 = inlined_call_operand.hbm [shape: f32[7,128], index: 0, kind: input, shape index: {}]
  %s1 = inlined_call_operand.hbm [shape: f32[3,128], index: 1, kind: input, shape index: {}]
  %s2 = inlined_call_operand.hbm [shape: f32[3,128], index: 2, kind: input, shape index: {}]
  %s3 = inlined_call_operand.hbm [shape: f32[2,128], index: 3, kind: output, shape index: {}]
  %s4 = sld [smem:[#allocation0]]
  $region34: #{tpu_custom_call.1} parent=0
    _
  %s6 = ssub.s32 1, %s4
  %s7 = scalar_select 0, %s6, %s4
  $region1: #{tpu_custom_call.1} parent=0
    #allocation2 [shape = 'u8[4096]{0}', space=vmem, size = 0x1000, scoped, tag = 'input window, operand 0, single buffered']
    #allocation3 [shape = 's32[1]{0}', space=sflag, size = 0x4, scoped, tag = 'scoped memory for tpu_custom_call.1']
    #allocation4 [shape = 's32[1]{0}', space=sflag, size = 0x4, scoped, tag = 'scoped memory for tpu_custom_call.1']
    #allocation5 [shape = 'u8[2048]{0}', space=vmem, size = 0x800, scoped, tag = 'input window, operand 1, single buffered']
    #allocation6 [shape = 's32[1]{0}', space=sflag, size = 0x4, scoped, tag = 'scoped memory for tpu_custom_call.1']
    #allocation7 [shape = 'u8[2048]{0}', space=vmem, size = 0x800, scoped, tag = 'input window, operand 2, single buffered']
    #allocation8 [shape = 'u8[1024]{0}', space=vmem, size = 0x400, scoped, tag = 'output window, operand 0, single buffered']
    %8 = vsyncpa [#allocation3], 0
    %9 = vsyncpa [#allocation6], 0
    %10 = vsyncpa [#allocation4], 0
    // Predicated region
    $region2: #{tpu_custom_call.1} parent=1 // pred_check
      _
    $region3: #{tpu_custom_call.1} parent=1 // pred_check_branch
      %12 = sbr.rel (0) target = $region5
    $region4: #{tpu_custom_call.1} parent=1 // pred_region
      %s14 = ssub.s32 128, 128
      %15 = vsyncadd [#allocation3], %s14
      %s17 = sshll.u32 [#allocation2], 4
      %s18 = int_to_ptr.vmem [resolvable:$true] %s17
      %20 = dma.hbm_to_vmem [thread:$0]  %s0, 128, %s18, [#allocation3]
    $region5: #{tpu_custom_call.1} parent=1 // pred_fallthru
      _
    // Predicated region
    $region6: #{tpu_custom_call.1} parent=1 // pred_check
      _
    $region7: #{tpu_custom_call.1} parent=1 // pred_check_branch
      %22 = sbr.rel (0) target = $region9
    $region8: #{tpu_custom_call.1} parent=1 // pred_region
      %s24 = ssub.s32 64, 64
      %25 = vsyncadd [#allocation6], %s24
      %s27 = sshll.u32 [#allocation5], 4
      %s28 = int_to_ptr.vmem [resolvable:$true] %s27
      %30 = dma.hbm_to_vmem [thread:$0]  %s1, 64, %s28, [#allocation6]
    $region9: #{tpu_custom_call.1} parent=1 // pred_fallthru
      _
    // Predicated region
    $region10: #{tpu_custom_call.1} parent=1 // pred_check
      _
    $region11: #{tpu_custom_call.1} parent=1 // pred_check_branch
      %32 = sbr.rel (0) target = $region13
    $region12: #{tpu_custom_call.1} parent=1 // pred_region
      %s34 = ssub.s32 64, 64
      %35 = vsyncadd [#allocation6], %s34
      %s37 = sshll.u32 [#allocation7], 4
      %s38 = int_to_ptr.vmem [resolvable:$true] %s37
      %40 = dma.hbm_to_vmem [thread:$0]  %s2, 64, %s38, [#allocation6]
    $region13: #{tpu_custom_call.1} parent=1 // pred_fallthru
      _
    // Predicated region
    $region14: #{tpu_custom_call.1} parent=1 // pred_check
      _
    $region15: #{tpu_custom_call.1} parent=1 // pred_check_branch
      %42 = sbr.rel (0) target = $region17
    $region16: #{tpu_custom_call.1} parent=1 // pred_region
      %43 = dma.done [#allocation3], 128
    $region17: #{tpu_custom_call.1} parent=1 // pred_fallthru
      _
    // Predicated region
    $region18: #{tpu_custom_call.1} parent=1 // pred_check
      _
    $region19: #{tpu_custom_call.1} parent=1 // pred_check_branch
      %45 = sbr.rel (0) target = $region21
    $region20: #{tpu_custom_call.1} parent=1 // pred_region
      %46 = dma.done [#allocation6], 64
    $region21: #{tpu_custom_call.1} parent=1 // pred_fallthru
      _
    // Predicated region
    $region22: #{tpu_custom_call.1} parent=1 // pred_check
      _
    $region23: #{tpu_custom_call.1} parent=1 // pred_check_branch
      %48 = sbr.rel (0) target = $region25
    $region24: #{tpu_custom_call.1} parent=1 // pred_region
      %49 = dma.done [#allocation6], 64
    $region25: #{tpu_custom_call.1} parent=1 // pred_fallthru
      _
    %v50 = vld [vmem:[#allocation2] sm:$0x7f]
    %v51 = vmul.f32 %v50, 10.0
    %v52 = vld [vmem:[#allocation5] sm:$0x7]
    %vm53 = vcmask 1042432
    %v54 = vsel %vm53, %v52, -inf
    %v55 = vrot.slane %v54, 4
    %v56 = vmax.f32 %v54, %v55
    %v57 = vrot.slane %v56, 2
    %v58 = vmax.f32 %v56, %v57
    %v59 = vrot.slane %v58, 1
    %v60 = vmax.f32 %v58, %v59
    %v61 = vlaneseq
    %v62 = vshrl.u32 %v61, 7
    %vm63 = vcmp.eq.f32.partialorder %v52, %v60
    %v64 = vsel %vm63, %v62, 3
    %v65 = vsel %vm53, %v64, 2147483647
    %v66 = vrot.slane %v65, 4
    %vm67 = vcmp.lt.s32.totalorder %v65, %v66
    %v68 = vsel %vm67, %v65, %v66
    %v69 = vrot.slane %v68, 2
    %vm70 = vcmp.lt.s32.totalorder %v68, %v69
    %v71 = vsel %vm70, %v68, %v69
    %v72 = vrot.slane %v71, 1
    %vm73 = vcmp.lt.s32.totalorder %v71, %v72
    %v74 = vsel %vm73, %v71, %v72
    %v75 = vld [vmem:[#allocation7] sm:$0x7]
    %v76 = vsel %vm53, %v75, -inf
    %v77 = vrot.slane %v76, 4
    %v78 = vmax.f32 %v76, %v77
    %v79 = vrot.slane %v78, 2
    %v80 = vmax.f32 %v78, %v79
    %v81 = vrot.slane %v80, 1
    %v82 = vmax.f32 %v80, %v81
    %vm83 = vcmp.eq.f32.partialorder %v75, %v82
    %v84 = vsel %vm83, %v62, 3
    %v85 = vsel %vm53, %v84, 2147483647
    %v86 = vrot.slane %v85, 4
    %vm87 = vcmp.lt.s32.totalorder %v85, %v86
    %v88 = vsel %vm87, %v85, %v86
    %v89 = vrot.slane %v88, 2
    %vm90 = vcmp.lt.s32.totalorder %v88, %v89
    %v91 = vsel %vm90, %v88, %v89
    %v92 = vrot.slane %v91, 1
    %vm93 = vcmp.lt.s32.totalorder %v91, %v92
    %v94 = vsel %vm93, %v91, %v92
    %vm95 = vcmp.eq.s32.totalorder %v74, 0
    %v96 = vsub.f32 90.0, %v51
    %vm97 = vcmp.eq.s32.totalorder %v74, 1
    %v98 = vadd.f32 %v51, 90.0
    %vm99 = vcmp.eq.s32.totalorder %v74, 2
    %v100 = vsel %vm99, %v51, 0.0
    %v101 = vsel %vm97, %v98, %v100
    %v102 = vsel %vm95, %v96, %v101
    %v104 = vrot.slane %v50, 6
    %v106 = vmul.f32 %v102, %v104
    %vm107 = vcmp.eq.s32.totalorder %v94, 0
    %vm108 = vcmp.eq.s32.totalorder %v94, 1
    %vm109 = vcmp.eq.s32.totalorder %v94, 2
    %v110 = vsel %vm109, %v51, 0.0
    %v111 = vsel %vm108, %v98, %v110
    %v112 = vsel %vm107, %v96, %v111
    %v113 = vrot.slane %v50, 3
    %v115 = vmul.f32 %v112, %v113
    %v116 = vrot.slane %v50, 5
    %v118 = vmul.f32 %v50, %v116
    %v119 = vrot.slane %v50, 4
    %v121 = vmul.f32 %v50, %v119
    %v123 = vrot.slane %v115, 3
    %v125 = vsub.f32 %v106, %v123
    %v126 = vmul.f32 %v125, %v125
    %v127 = vsub.f32 %v118, %v113
    %v128 = vsub.f32 %v121, %v113
    %v129 = vmul.f32 %v127, %v127
    %v131 = vrot.slane %v126, 7
    %v133 = vadd.f32 %v129, %v131
    %v134 = vadd.f32 %v133, 1.0
    %v135 = vlog2.pop %v134
    %v136 = vmul.f32 %v135, 0.6931472
    %v137 = vmul.f32 %v128, %v128
    %v138 = vrot.slane %v126, 6
    %v140 = vadd.f32 %v137, %v138
    %v141 = vadd.f32 %v140, 1.0
    %v142 = vlog2.pop %v141
    %v143 = vmul.f32 %v142, 0.6931472
    %v145 = vrot.slane %v143, 1
    %v147 = vadd.f32 %v136, %v145
    %v148 = vmul.f32 %v147, 0.5
    %149 = vst [vmem:[#allocation8 - $0x1] sm:$0x2] %v148
    %150 = vst [vmem:[#allocation8 - $0x5] sm:$0x40] %v50
    // Predicated region
    $region26: #{tpu_custom_call.1} parent=1 // pred_check
      _
    $region27: #{tpu_custom_call.1} parent=1 // pred_check_branch
      %152 = sbr.rel (0) target = $region29
    $region28: #{tpu_custom_call.1} parent=1 // pred_region
      %s154 = ssub.s32 32, 32
      %155 = vsyncadd [#allocation4], %s154
      %s157 = sshll.u32 [#allocation8], 4
      %s158 = int_to_ptr.vmem [resolvable:$true] %s157
      %160 = dma.vmem_to_hbm [thread:$0]  %s158, 32, %s3, [#allocation4]
    $region29: #{tpu_custom_call.1} parent=1 // pred_fallthru
      _
    // Predicated region
    $region30: #{tpu_custom_call.1} parent=1 // pred_check
      _
    $region31: #{tpu_custom_call.1} parent=1 // pred_check_branch
      %162 = sbr.rel (0) target = $region33
    $region32: #{tpu_custom_call.1} parent=1 // pred_region
      %163 = dma.done [#allocation4], 32
    $region33: #{tpu_custom_call.1} parent=1 // pred_fallthru
      _
    %164 = vsyncpa [#allocation3], 1
    %165 = vsyncpa [#allocation6], 1
    %166 = vsyncpa [#allocation4], 1

</llo_original>
